<compile_context>
chip_gen: v5e
topology: v5e:2x2
jax: 0.10.0
libtpu: 0.0.40
codegen_flags: <defaults>
</compile_context>

<pallas_src>
import jax
import jax.numpy as jnp
import numpy as np
from jax.experimental import pallas as pl
from jax.experimental.pallas import tpu as pltpu

_LANES = 128
_TARGET_STEP_BYTES = 8 * 1024 * 1024     # native-dtype input bytes per grid step
_F32_STEP_CAP_BYTES = 10 * 1024 * 1024   # cap on f32 compute footprint per step
_VMEM_LIMIT_BYTES = 40 * 1024 * 1024     # < 64 MiB physical VMEM on v7x


def _l1_recovered_kernel(air_ref, t_ref, haze_ref, clean_ref, out_ref):
    """One grid step = one (batch, row-tile).  Emits a lane-dense partial sum."""
    b = pl.program_id(0)

    a = air_ref[b]                              # per-batch airlight scalar (SMEM, f32)
    t = t_ref[0, 0].astype(jnp.float32)         # (R_TILE, 128)
    haze = haze_ref[0].astype(jnp.float32)      # (C, R_TILE, 128)
    clean = clean_ref[0].astype(jnp.float32)    # (C, R_TILE, 128)

    # Reciprocal / airlight term computed once on the (R_TILE, 128) t tile; the
    # broadcast over C is a free reuse of the same vregs (C lives outside the
    # minor (8, 128) tile).
    inv_t = pl.reciprocal(t, approx=False)      # exact 1/t (else branch: no eps)
    air_term = a * (1.0 - t)                    # (R_TILE, 128)

    rec = (haze - air_term[None]) * inv_t[None]     # (C, R_TILE, 128)
    rec = jnp.clip(rec, 0.0, 1.0)
    diff = jnp.abs(rec - clean)

    # Partial reduction with no cross-lane work: VPU adds over C, then over
    # groups of 8 sublanes (free metadata reshape).  Final sum is in the
    # wrapper.
    s = jnp.sum(diff, axis=0)                   # (R_TILE, 128)
    r = s.shape[0]
    if r % 8 == 0 and r > 8:
        s = s.reshape(r // 8, 8, _LANES).sum(axis=0)    # (8, 128)
    out_ref[...] = s[None, None]


def _pick_row_tile(rows, max_rows, prefer_split):
    """Largest R_TILE that divides `rows`, is a multiple of 8 (or == rows),
    stays under the per-step byte budget, and (when prefer_split) leaves at
    least two tiles so both v7x TensorCores get work."""
    cap = max_rows
    if prefer_split:
        cap = min(cap, rows // 2)
    cap = max(cap, 8)
    if rows <= cap and not prefer_split:
        return rows
    if rows % 8 != 0:
        return rows                     # small input: single full-extent block
    n8 = rows // 8
    best = 8
    d = 1
    while d * d <= n8:
        if n8 % d == 0:
            for c in (d, n8 // d):
                r = c * 8
                if best < r <= cap:
                    best = r
        d += 1
    return best


def recovered_clean_images_loss_v2(transmission_map, airlight, haze_image,
                                   clean_image, loss_type="normal"):
    assert loss_type == "normal"
    B, C, H, W = haze_image.shape
    assert clean_image.shape == (B, C, H, W)
    assert transmission_map.shape[:2] == (B, 1)

    scale = W // transmission_map.shape[-1]
    if scale != 1:
        # TODO(synk): bilinear (align_corners=False) downsample of haze/clean
        # for scale != 1 is not implemented in-kernel; examples use scale == 1.
        raise NotImplementedError("scale != 1 path not implemented")
    assert transmission_map.shape == (B, 1, H, W)

    hw = H * W

    # ---- lane-dense 4D layout + byte-based tile sizing ----------------------
    rows_raw = -(-hw // _LANES)
    bytes_per_row = _LANES * (C * haze_image.dtype.itemsize
                              + C * clean_image.dtype.itemsize
                              + transmission_map.dtype.itemsize)
    f32_bytes_per_row = _LANES * (2 * C + 1) * 4
    max_rows = max(8, min(_TARGET_STEP_BYTES // bytes_per_row,
                          _F32_STEP_CAP_BYTES // f32_bytes_per_row))
    prefer_split = (B == 1 and rows_raw >= 16)       # keep grid >= 2 steps (v7x)
    needs_tiling = rows_raw > max_rows or prefer_split

    rows = (-(-rows_raw // 8) * 8) if needs_tiling else rows_raw
    hw_pad = rows * _LANES

    # Flatten spatial dims.  Padded pixels contribute exactly 0 to the L1 sum:
    # t = 1, haze = clean = 0  =>  rec = 0, |0 - 0| = 0.  No dtype cast here --
    # the kernel upcasts in VMEM, so the DMA moves the native input dtype.
    t = transmission_map.reshape(B, 1, hw)
    haze = haze_image.reshape(B, C, hw)
    clean = clean_image.reshape(B, C, hw)
    if hw_pad != hw:
        pad = ((0, 0), (0, 0), (0, hw_pad - hw))
        t = jnp.pad(t, pad, constant_values=1)
        haze = jnp.pad(haze, pad)
        clean = jnp.pad(clean, pad)
    t = t.reshape(B, 1, rows, _LANES)
    haze = haze.reshape(B, C, rows, _LANES)
    clean = clean.reshape(B, C, rows, _LANES)
    air = airlight.reshape(B).astype(jnp.float32)    # flat SMEM scalar table

    r_tile = _pick_row_tile(rows, max_rows, prefer_split)
    num_tiles = rows // r_tile
    out_rows = 8 if (r_tile % 8 == 0 and r_tile > 8) else r_tile

    bytes_accessed = (haze.size * haze.dtype.itemsize
                      + clean.size * clean.dtype.itemsize
                      + t.size * t.dtype.itemsize
                      + air.size * 4
                      + B * num_tiles * out_rows * _LANES * 4)
    cost = pl.CostEstimate(flops=8 * B * C * hw_pad,
                           transcendentals=B * hw_pad,   # advisory only
                           bytes_accessed=bytes_accessed)

    partials = pl.pallas_call(
        _l1_recovered_kernel,
        out_shape=jax.ShapeDtypeStruct((B, num_tiles, out_rows, _LANES),
                                       jnp.float32),
        grid_spec=pltpu.PrefetchScalarGridSpec(
            num_scalar_prefetch=0,
            grid=(B, num_tiles),
            in_specs=[
                pl.BlockSpec(memory_space=pltpu.MemorySpace.SMEM),   # airlight (B,)
                pl.BlockSpec((1, 1, r_tile, _LANES), lambda b, i: (b, 0, i, 0)),
                pl.BlockSpec((1, C, r_tile, _LANES), lambda b, i: (b, 0, i, 0)),
                pl.BlockSpec((1, C, r_tile, _LANES), lambda b, i: (b, 0, i, 0)),
            ],
            out_specs=pl.BlockSpec((1, 1, out_rows, _LANES),
                                   lambda b, i: (b, i, 0, 0)),
        ),
        compiler_params=pltpu.CompilerParams(
            dimension_semantics=("parallel", "parallel"),
            vmem_limit_bytes=_VMEM_LIMIT_BYTES),
        cost_estimate=cost,
    )(air, t, haze, clean)

    # Final reduction + mean over the ORIGINAL (unpadded) element count.
    return jnp.sum(partials) / jnp.float32(B * C * hw)


def _reference(transmission_map, airlight, haze_image, clean_image):
    t = transmission_map.astype(jnp.float32)
    a = airlight.reshape(-1, 1, 1, 1).astype(jnp.float32)
    rec = (haze_image.astype(jnp.float32) - a * (1.0 - t)) / t
    rec = jnp.clip(rec, 0.0, 1.0)
    return jnp.mean(jnp.abs(rec - clean_image.astype(jnp.float32)))


if __name__ == "__main__":
    def _check(B, C, H, W):
        key = jax.random.PRNGKey(0)
        key = jax.random.fold_in(key, B * 1000 + H)
        k_t, k_a, k_h, k_c = jax.random.split(key, 4)
        t = jax.random.uniform(k_t, (B, 1, H, W), jnp.float32,
                               minval=0.05, maxval=1.0)
        a = jax.random.uniform(k_a, (B, 1), jnp.float32, minval=0.7, maxval=1.0)
        h = jax.random.uniform(k_h, (B, C, H, W), jnp.float32)
        c = jax.random.uniform(k_c, (B, C, H, W), jnp.float32)
        loss = jax.block_until_ready(
            recovered_clean_images_loss_v2(t, a, h, c))
        ref = jax.block_until_ready(_reference(t, a, h, c))
        assert np.allclose(np.asarray(loss), np.asarray(ref),
                           rtol=1e-5, atol=1e-5), \
            (B, C, H, W, float(loss), float(ref))

    _check(2, 3, 16, 16)     # small: one full-extent tile per batch
    _check(1, 3, 128, 128)   # B == 1: tiled rows + fold-to-(8,128) partial path
    _check(2, 3, 10, 10)     # HW not a multiple of 128: zero-contribution padding
    print("KERNEL_OK")
</pallas_src>

<mosaic_0001>
module attributes {stable_mosaic.version = 11 : i64} {
  func.func @_l1_recovered_kernel(%arg0: i32, %arg1: i32, %arg2: memref<2xf32, #tpu.memory_space<smem>>, %arg3: memref<1x1x2x128xf32, #tpu.memory_space<vmem>>, %arg4: memref<1x3x2x128xf32, #tpu.memory_space<vmem>>, %arg5: memref<1x3x2x128xf32, #tpu.memory_space<vmem>>, %arg6: memref<1x1x2x128xf32, #tpu.memory_space<vmem>>) attributes {dimension_semantics = [#tpu.dimension_semantics<parallel>, #tpu.dimension_semantics<parallel>], iteration_bounds = array<i64: 2, 1>, scalar_prefetch = 0 : i64, scratch_operands = 0 : i64, tpu.core_type = #tpu.core_type<tc>, window_params = [{transform_indices = @transform_0, window_bounds = array<i64: 2>}, {transform_indices = @transform_1, window_bounds = array<i64: 1, 1, 2, 128>}, {transform_indices = @transform_2, window_bounds = array<i64: 1, 3, 2, 128>}, {transform_indices = @transform_3, window_bounds = array<i64: 1, 3, 2, 128>}, {transform_indices = @transform_4, window_bounds = array<i64: 1, 1, 2, 128>}]} {
    %0 = arith.index_cast %arg0 : i32 to index
    %1 = memref.load %arg2[%0] : memref<2xf32, #tpu.memory_space<smem>>
    %c0 = arith.constant 0 : index
    %c0_0 = arith.constant 0 : index
    %c0_1 = arith.constant 0 : index
    %c0_2 = arith.constant 0 : index
    %2 = vector.load %arg3[%c0, %c0_0, %c0_1, %c0_2] : memref<1x1x2x128xf32, #tpu.memory_space<vmem>>, vector<1x1x2x128xf32>
    %3 = vector.shape_cast %2 : vector<1x1x2x128xf32> to vector<2x128xf32>
    %c0_3 = arith.constant 0 : index
    %c0_4 = arith.constant 0 : index
    %c0_5 = arith.constant 0 : index
    %c0_6 = arith.constant 0 : index
    %4 = vector.load %arg4[%c0_3, %c0_4, %c0_5, %c0_6] : memref<1x3x2x128xf32, #tpu.memory_space<vmem>>, vector<1x3x2x128xf32>
    %5 = vector.shape_cast %4 : vector<1x3x2x128xf32> to vector<3x2x128xf32>
    %c0_7 = arith.constant 0 : index
    %c0_8 = arith.constant 0 : index
    %c0_9 = arith.constant 0 : index
    %c0_10 = arith.constant 0 : index
    %6 = vector.load %arg5[%c0_7, %c0_8, %c0_9, %c0_10] : memref<1x3x2x128xf32, #tpu.memory_space<vmem>>, vector<1x3x2x128xf32>
    %7 = vector.shape_cast %6 : vector<1x3x2x128xf32> to vector<3x2x128xf32>
    %8 = tpu.reciprocal %3 : vector<2x128xf32> -> vector<2x128xf32>
    %cst = arith.constant 1.000000e+00 : f32
    %9 = vector.broadcast %cst : f32 to vector<2x128xf32>
    %10 = arith.subf %9, %3 : vector<2x128xf32>
    %11 = vector.broadcast %1 : f32 to vector<2x128xf32>
    %12 = arith.mulf %11, %10 : vector<2x128xf32>
    %13 = vector.shape_cast %12 : vector<2x128xf32> to vector<1x2x128xf32>
    %14 = vector.broadcast %13 : vector<1x2x128xf32> to vector<3x2x128xf32>
    %15 = arith.subf %5, %14 : vector<3x2x128xf32>
    %16 = vector.shape_cast %8 : vector<2x128xf32> to vector<1x2x128xf32>
    %17 = vector.broadcast %16 : vector<1x2x128xf32> to vector<3x2x128xf32>
    %18 = arith.mulf %15, %17 : vector<3x2x128xf32>
    %cst_11 = arith.constant 0.000000e+00 : f32
    %cst_12 = arith.constant 1.000000e+00 : f32
    %19 = vector.broadcast %cst_11 : f32 to vector<3x2x128xf32>
    %20 = arith.maximumf %19, %18 : vector<3x2x128xf32>
    %21 = vector.broadcast %cst_12 : f32 to vector<3x2x128xf32>
    %22 = arith.minimumf %21, %20 : vector<3x2x128xf32>
    %23 = arith.subf %22, %7 : vector<3x2x128xf32>
    %24 = math.absf %23 : vector<3x2x128xf32>
    %cst_13 = arith.constant dense<0.000000e+00> : vector<2x128xf32>
    %25 = vector.multi_reduction <add>, %24, %cst_13 [0] : vector<3x2x128xf32> to vector<2x128xf32>
    %26 = vector.shape_cast %25 : vector<2x128xf32> to vector<1x1x2x128xf32>
    %c0_14 = arith.constant 0 : index
    %c0_15 = arith.constant 0 : index
    %c0_16 = arith.constant 0 : index
    %c0_17 = arith.constant 0 : index
    %27 = vector.load %arg6[%c0_14, %c0_15, %c0_16, %c0_17] : memref<1x1x2x128xf32, #tpu.memory_space<vmem>>, vector<1x1x2x128xf32>
    tpu.vector_store %arg6[%c0_14, %c0_15, %c0_16, %c0_17], %26 {strides = array<i32>} : memref<1x1x2x128xf32, #tpu.memory_space<vmem>>, vector<1x1x2x128xf32>,
    return
  }
  func.func @transform_0(%arg0: i32, %arg1: i32) -> i32 {
    %c0_i32 = arith.constant 0 : i32
    %c0_i32_0 = arith.constant 0 : i32
    return %c0_i32 : i32
  }
  func.func @transform_1(%arg0: i32, %arg1: i32) -> (i32, i32, i32, i32) {
    %c0_i32 = arith.constant 0 : i32
    %c0_i32_0 = arith.constant 0 : i32
    %c0_i32_1 = arith.constant 0 : i32
    return %arg0, %c0_i32, %arg1, %c0_i32_0 : i32, i32, i32, i32
  }
  func.func @transform_2(%arg0: i32, %arg1: i32) -> (i32, i32, i32, i32) {
    %c0_i32 = arith.constant 0 : i32
    %c0_i32_0 = arith.constant 0 : i32
    %c0_i32_1 = arith.constant 0 : i32
    return %arg0, %c0_i32, %arg1, %c0_i32_0 : i32, i32, i32, i32
  }
  func.func @transform_3(%arg0: i32, %arg1: i32) -> (i32, i32, i32, i32) {
    %c0_i32 = arith.constant 0 : i32
    %c0_i32_0 = arith.constant 0 : i32
    %c0_i32_1 = arith.constant 0 : i32
    return %arg0, %c0_i32, %arg1, %c0_i32_0 : i32, i32, i32, i32
  }
  func.func @transform_4(%arg0: i32, %arg1: i32) -> (i32, i32, i32, i32) {
    %c0_i32 = arith.constant 0 : i32
    %c0_i32_0 = arith.constant 0 : i32
    %c0_i32_1 = arith.constant 0 : i32
    return %arg0, %arg1, %c0_i32, %c0_i32_0 : i32, i32, i32, i32
  }
}

</mosaic_0001>

<llo_original>
// kernel: tpu_custom_call.1
$region0: #{tpu_custom_call.1}
  #allocation0 [shape = 'u32[]', space=smem, size = 0x4, offset = 0x4, fixed_abs, tag = 'smem constant byte address 0x4 - core index']
  #allocation1 [shape = 'u32[72,128]{1,0:T(1,128)}', space=vmem, size = 0x9000, scoped, tag = 'internal scratch']
  %s0 = inlined_call_operand.hbm [shape: f32[2], index: 0, kind: input, shape index: {}]
  %s1 = inlined_call_operand.hbm [shape: f32[2,1,2,128], index: 1, kind: input, shape index: {}]
  %s2 = inlined_call_operand.hbm [shape: f32[2,3,2,128], index: 2, kind: input, shape index: {}]
  %s3 = inlined_call_operand.hbm [shape: f32[2,3,2,128], index: 3, kind: input, shape index: {}]
  %s4 = inlined_call_operand.hbm [shape: f32[2,1,2,128], index: 4, kind: output, shape index: {}]
  %s5 = sld [smem:[#allocation0]]
  $region65: #{tpu_custom_call.1} parent=0
    _
  %s7 = ssub.s32 1, %s5
  %s8 = scalar_select 0, %s7, %s5
  $region1: #{tpu_custom_call.1} parent=0
    #allocation2 [shape = 'u8[512]{0}', space=smem, size = 0x200, scoped, tag = 'input window, operand 0, single buffered']
    #allocation3 [shape = 's32[2]{0}', space=sflag, size = 0x8, scoped, tag = 'scoped memory for tpu_custom_call.1']
    #allocation4 [shape = 's32[2]{0}', space=sflag, size = 0x8, scoped, tag = 'scoped memory for tpu_custom_call.1']
    #allocation5 [shape = 's32[2]{0}', space=sflag, size = 0x8, scoped, tag = 'scoped memory for tpu_custom_call.1']
    #allocation6 [shape = 'u8[2048]{0}', space=vmem, size = 0x800, scoped, tag = 'input window, operand 1']
    #allocation7 [shape = 'u8[6144]{0}', space=vmem, size = 0x1800, scoped, tag = 'input window, operand 2']
    #allocation8 [shape = 's32[2]{0}', space=sflag, size = 0x8, scoped, tag = 'scoped memory for tpu_custom_call.1']
    #allocation9 [shape = 'u8[6144]{0}', space=vmem, size = 0x1800, scoped, tag = 'input window, operand 3']
    #allocation10 [shape = 'u8[2048]{0}', space=vmem, size = 0x800, scoped, tag = 'output window, operand 0']
    %9 = vsyncpa [#allocation5], 0
    %10 = vsyncpa [#allocation3], 0
    %s11 = scalar_lea.sflag [#allocation3], 1
    %12 = vsyncpa %s11, 0
    %13 = vsyncpa [#allocation8], 0
    %s14 = scalar_lea.sflag [#allocation8], 1
    %15 = vsyncpa %s14, 0
    %16 = vsyncpa [#allocation4], 0
    %s17 = scalar_lea.sflag [#allocation4], 1
    %18 = vsyncpa %s17, 0
    loop: start=0, step=1, limit=4
    $region2: #{tpu_custom_call.1} parent=1 // loop_pre_header
      _
    $region3: #{tpu_custom_call.1} parent=1 // loop_header
      %s20 = sphi 0, %s24
      %p21 = scmp.ge.s32.totalorder %s20, 4
      %s27 = sphi 0, %s39
      %s28 = sphi 0, %s35
      %s29 = sphi 0, %s27
      %s30 = sphi 0, %s28
      %s31 = sphi 0, %s29
      %s32 = sphi 0, %s30
      %s40 = sphi 0, %s40
      %s42 = sphi 0, %s40
      %s43 = sphi 0, %s42
      %s57 = sphi 0, %s43
      %s65 = sphi 0, %s67
      %s68 = sphi 0, %s65
      %s69 = sphi 0, %s68
      %s85 = sphi 0, %s69
      %s93 = sphi 0, %s95
      %s96 = sphi 0, %s93
      %s97 = sphi 0, %s96
      %s113 = sphi 0, %s97
      %s121 = sphi 0, %s123
      %s124 = sphi 0, %s121
      %s125 = sphi 0, %s124
      %s141 = sphi 0, %s125
      %s149 = sphi 0, %s151
      %s152 = sphi 0, %s149
      %s153 = sphi 0, %s152
      %s169 = sphi 0, %s153
    $region4: #{tpu_custom_call.1} parent=1 // loop_header_branch
      %23 = sbr.rel (%p21) target = $region8
    $region5: #{tpu_custom_call.1} parent=1 // loop_body
      %s25 = ssub.s32 %s20, 1
      %s26 = ssub.s32 %s20, 2
      %s33 = sadd.s32 1, %s28
      %p34 = scmp.ge.s32.totalorder %s33, 1
      %s35 = scalar_select %p34, 0, %s33
      %s36 = sadd.s32 1, %s27
      %s37 = scalar_select %p34, %s36, %s27
      %p38 = scmp.ge.s32.totalorder %s37, 2
      %s39 = scalar_select %p38, 0, %s37
      %s41 = sadd.s32 %s40, 1
      %p44 = scmp.eq.s32.totalorder %s20, 1
      %p45 = scmp.ne.s32.totalorder %s40, %s42
      %p46 = scmp.eq.s32.totalorder %s20, 0
      %p47 = por %p45, %p46
      %p48 = scmp.ne.s32.totalorder %s40, %s42
      %p49 = scmp.eq.s32.totalorder %s25, 1
      %p50 = por %p48, %p49
      %p51 = scmp.ne.s32.totalorder %s42, %s43
      %p52 = scmp.eq.s32.totalorder %s25, 0
      %p53 = por %p51, %p52
      %p54 = scmp.ne.s32.totalorder %s42, %s43
      %p55 = scmp.eq.s32.totalorder %s26, 1
      %p56 = por %p54, %p55
      %p58 = scmp.ne.s32.totalorder %s43, %s57
      %p59 = scmp.eq.s32.totalorder %s26, 0
      %p60 = por %p58, %p59
      %s61 = ssub.s32 %s27, %s39
      %s62 = ssub.s32 %s28, %s35
      %s63 = sor.u32 %s61, %s62
      %p64 = scmp.eq.s32.totalorder %s63, 0
      %s66 = sadd.s32 %s65, 1
      %s67 = scalar_select %p64, %s65, %s66
      %p70 = pneg %p64
      %p71 = scmp.eq.s32.totalorder %s20, 1
      %p72 = por %p70, %p71
      %p73 = scmp.ne.s32.totalorder %s65, %s68
      %p74 = scmp.eq.s32.totalorder %s20, 0
      %p75 = por %p73, %p74
      %p76 = scmp.ne.s32.totalorder %s65, %s68
      %p77 = scmp.eq.s32.totalorder %s25, 1
      %p78 = por %p76, %p77
      %p79 = scmp.ne.s32.totalorder %s68, %s69
      %p80 = scmp.eq.s32.totalorder %s25, 0
      %p81 = por %p79, %p80
      %p82 = scmp.ne.s32.totalorder %s68, %s69
      %p83 = scmp.eq.s32.totalorder %s26, 1
      %p84 = por %p82, %p83
      %p86 = scmp.ne.s32.totalorder %s69, %s85
      %p87 = scmp.eq.s32.totalorder %s26, 0
      %p88 = por %p86, %p87
      %s89 = ssub.s32 %s27, %s39
      %s90 = ssub.s32 %s28, %s35
      %s91 = sor.u32 %s89, %s90
      %p92 = scmp.eq.s32.totalorder %s91, 0
      %s94 = sadd.s32 %s93, 1
      %s95 = scalar_select %p92, %s93, %s94
      %p98 = pneg %p92
      %p99 = scmp.eq.s32.totalorder %s20, 1
      %p100 = por %p98, %p99
      %p101 = scmp.ne.s32.totalorder %s93, %s96
      %p102 = scmp.eq.s32.totalorder %s20, 0
      %p103 = por %p101, %p102
      %p104 = scmp.ne.s32.totalorder %s93, %s96
      %p105 = scmp.eq.s32.totalorder %s25, 1
      %p106 = por %p104, %p105
      %p107 = scmp.ne.s32.totalorder %s96, %s97
      %p108 = scmp.eq.s32.totalorder %s25, 0
      %p109 = por %p107, %p108
      %p110 = scmp.ne.s32.totalorder %s96, %s97
      %p111 = scmp.eq.s32.totalorder %s26, 1
      %p112 = por %p110, %p111
      %p114 = scmp.ne.s32.totalorder %s97, %s113
      %p115 = scmp.eq.s32.totalorder %s26, 0
      %p116 = por %p114, %p115
      %s117 = ssub.s32 %s27, %s39
      %s118 = ssub.s32 %s28, %s35
      %s119 = sor.u32 %s117, %s118
      %p120 = scmp.eq.s32.totalorder %s119, 0
      %s122 = sadd.s32 %s121, 1
      %s123 = scalar_select %p120, %s121, %s122
      %p126 = pneg %p120
      %p127 = scmp.eq.s32.totalorder %s20, 1
      %p128 = por %p126, %p127
      %p129 = scmp.ne.s32.totalorder %s121, %s124
      %p130 = scmp.eq.s32.totalorder %s20, 0
      %p131 = por %p129, %p130
      %p132 = scmp.ne.s32.totalorder %s121, %s124
      %p133 = scmp.eq.s32.totalorder %s25, 1
      %p134 = por %p132, %p133
      %p135 = scmp.ne.s32.totalorder %s124, %s125
      %p136 = scmp.eq.s32.totalorder %s25, 0
      %p137 = por %p135, %p136
      %p138 = scmp.ne.s32.totalorder %s124, %s125
      %p139 = scmp.eq.s32.totalorder %s26, 1
      %p140 = por %p138, %p139
      %p142 = scmp.ne.s32.totalorder %s125, %s141
      %p143 = scmp.eq.s32.totalorder %s26, 0
      %p144 = por %p142, %p143
      %s145 = ssub.s32 %s27, %s39
      %s146 = ssub.s32 %s28, %s35
      %s147 = sor.u32 %s145, %s146
      %p148 = scmp.eq.s32.totalorder %s147, 0
      %s150 = sadd.s32 %s149, 1
      %s151 = scalar_select %p148, %s149, %s150
      %p154 = pneg %p148
      %p155 = scmp.eq.s32.totalorder %s20, 1
      %p156 = por %p154, %p155
      %p157 = scmp.ne.s32.totalorder %s149, %s152
      %p158 = scmp.eq.s32.totalorder %s20, 0
      %p159 = por %p157, %p158
      %p160 = scmp.ne.s32.totalorder %s149, %s152
      %p161 = scmp.eq.s32.totalorder %s25, 1
      %p162 = por %p160, %p161
      %p163 = scmp.ne.s32.totalorder %s152, %s153
      %p164 = scmp.eq.s32.totalorder %s25, 0
      %p165 = por %p163, %p164
      %p166 = scmp.ne.s32.totalorder %s152, %s153
      %p167 = scmp.eq.s32.totalorder %s26, 1
      %p168 = por %p166, %p167
      %p170 = scmp.ne.s32.totalorder %s153, %s169
      %p171 = scmp.eq.s32.totalorder %s26, 0
      %p172 = por %p170, %p171
      %p173 = scmp.le.s32.totalorder 1, %s20
      %p174 = scmp.lt.s32.totalorder %s20, 3
      %p175 = pnand %p173, %p174
      %p176 = pneg %p175
      // Predicated region
      $region9: #{tpu_custom_call.1} parent=5 // pred_check
        _
      $region10: #{tpu_custom_call.1} parent=5 // pred_check_branch
        %178 = sbr.rel (%p175) target = $region12
      $region11: #{tpu_custom_call.1} parent=5 // pred_region
        %s179 = ssub.s32 %s20, 1
        // Predicated region
        $region13: #{tpu_custom_call.1} parent=11 // pred_check
          %p180 = pneg %p53
        $region14: #{tpu_custom_call.1} parent=11 // pred_check_branch
          %182 = sbr.rel (%p180) target = $region16
        $region15: #{tpu_custom_call.1} parent=11 // pred_region
          %184 = vsyncadd [#allocation5], 0
          %s186 = sshll.u32 %s0, 4
          %s187 = int_to_ptr.hbm [resolvable:$true] %s186
          %189 = dma.hbm_to_smem %s187, 16, [#allocation2], [#allocation5]
        $region16: #{tpu_custom_call.1} parent=11 // pred_fallthru
          _
      $region12: #{tpu_custom_call.1} parent=5 // pred_fallthru
        _
      %p190 = scmp.lt.s32.totalorder %s20, 2
      // Predicated region
      $region17: #{tpu_custom_call.1} parent=5 // pred_check
        %p191 = pneg %p190
      $region18: #{tpu_custom_call.1} parent=5 // pred_check_branch
        %193 = sbr.rel (%p191) target = $region20
      $region19: #{tpu_custom_call.1} parent=5 // pred_region
        // Predicated region
        $region21: #{tpu_custom_call.1} parent=19 // pred_check
          %p194 = pneg %p75
        $region22: #{tpu_custom_call.1} parent=19 // pred_check_branch
          %196 = sbr.rel (%p194) target = $region24
        $region23: #{tpu_custom_call.1} parent=19 // pred_region
          %s197 = sand.u32 %s65, 1
          %s198 = scalar_lea.sflag [#allocation3], %s197
          %s199 = sand.u32 %s65, 1
          %s200 = smul.addr %s199, 2
          %s201 = scalar_lea.vmem [#allocation6], %s200
          %203 = vsyncadd %s198, 0
          %s204 = sadd.s32 %s28, %s27
          %s205 = smul.addr %s204, 2
          %s206 = scalar_lea.hbm %s1, %s205
          %s208 = sshll.u32 %s206, 4
          %s209 = int_to_ptr.hbm [resolvable:$true] %s208
          %s210 = sshll.u32 %s201, 4
          %s211 = int_to_ptr.vmem [resolvable:$true] %s210
          %213 = dma.hbm_to_vmem [thread:$0]  %s209, 32, %s211, %s198
        $region24: #{tpu_custom_call.1} parent=19 // pred_fallthru
          _
        // Predicated region
        $region25: #{tpu_custom_call.1} parent=19 // pred_check
          %p214 = pneg %p103
        $region26: #{tpu_custom_call.1} parent=19 // pred_check_branch
          %216 = sbr.rel (%p214) target = $region28
        $region27: #{tpu_custom_call.1} parent=19 // pred_region
          %s217 = sand.u32 %s20, 1
          %s218 = scalar_lea.sflag [#allocation8], %s217
          %s219 = sand.u32 %s93, 1
          %s220 = smul.addr %s219, 6
          %s221 = scalar_lea.vmem [#allocation7], %s220
          %223 = vsyncadd %s218, 0
          %s224 = smul.addr %s27, 3
          %s225 = sadd.s32 %s28, %s224
          %s226 = smul.addr %s225, 2
          %s227 = scalar_lea.hbm %s2, %s226
          %s228 = sshll.u32 %s227, 4
          %s229 = int_to_ptr.hbm [resolvable:$true] %s228
          %s230 = sshll.u32 %s221, 4
          %s231 = int_to_ptr.vmem [resolvable:$true] %s230
          %236 = dma.hbm_to_vmem [thread:$0]  %s229, 96, %s231, %s218, 32, 32, 2
        $region28: #{tpu_custom_call.1} parent=19 // pred_fallthru
          _
        // Predicated region
        $region29: #{tpu_custom_call.1} parent=19 // pred_check
          %p237 = pneg %p131
        $region30: #{tpu_custom_call.1} parent=19 // pred_check_branch
          %239 = sbr.rel (%p237) target = $region32
        $region31: #{tpu_custom_call.1} parent=19 // pred_region
          %s240 = sand.u32 %s20, 1
          %s241 = scalar_lea.sflag [#allocation8], %s240
          %s242 = sand.u32 %s121, 1
          %s243 = smul.addr %s242, 6
          %s244 = scalar_lea.vmem [#allocation9], %s243
          %246 = vsyncadd %s241, 0
          %s247 = smul.addr %s27, 3
          %s248 = sadd.s32 %s28, %s247
          %s249 = smul.addr %s248, 2
          %s250 = scalar_lea.hbm %s3, %s249
          %s251 = sshll.u32 %s250, 4
          %s252 = int_to_ptr.hbm [resolvable:$true] %s251
          %s253 = sshll.u32 %s244, 4
          %s254 = int_to_ptr.vmem [resolvable:$true] %s253
          %259 = dma.hbm_to_vmem [thread:$0]  %s252, 96, %s254, %s241, 32, 32, 2
        $region32: #{tpu_custom_call.1} parent=19 // pred_fallthru
          _
      $region20: #{tpu_custom_call.1} parent=5 // pred_fallthru
        _
      %p260 = scmp.le.s32.totalorder 1, %s20
      %p261 = scmp.lt.s32.totalorder %s20, 3
      %p262 = pnand %p260, %p261
      %p263 = pneg %p262
      // Predicated region
      $region33: #{tpu_custom_call.1} parent=5 // pred_check
        _
      $region34: #{tpu_custom_call.1} parent=5 // pred_check_branch
        %265 = sbr.rel (%p262) target = $region36
      $region35: #{tpu_custom_call.1} parent=5 // pred_region
        %s266 = ssub.s32 %s20, 1
        // Predicated region
        $region37: #{tpu_custom_call.1} parent=35 // pred_check
          %p267 = pneg %p53
        $region38: #{tpu_custom_call.1} parent=35 // pred_check_branch
          %269 = sbr.rel (%p267) target = $region40
        $region39: #{tpu_custom_call.1} parent=35 // pred_region
          %271 = dma.done [#allocation5], 16
        $region40: #{tpu_custom_call.1} parent=35 // pred_fallthru
          _
        %s272 = sand.u32 %s68, 1
        %s273 = scalar_lea.sflag [#allocation3], %s272
        %s274 = sand.u32 %s68, 1
        %s275 = smul.addr %s274, 2
        %s276 = scalar_lea.vmem [#allocation6], %s275
        // Predicated region
        $region41: #{tpu_custom_call.1} parent=35 // pred_check
          %p277 = pneg %p81
        $region42: #{tpu_custom_call.1} parent=35 // pred_check_branch
          %279 = sbr.rel (%p277) target = $region44
        $region43: #{tpu_custom_call.1} parent=35 // pred_region
          %281 = dma.done %s273, 32
        $region44: #{tpu_custom_call.1} parent=35 // pred_fallthru
          _
        %s282 = sand.u32 %s25, 1
        %s283 = scalar_lea.sflag [#allocation8], %s282
        %s284 = sand.u32 %s96, 1
        %s285 = smul.addr %s284, 6
        %s286 = scalar_lea.vmem [#allocation7], %s285
        // Predicated region
        $region45: #{tpu_custom_call.1} parent=35 // pred_check
          %p287 = pneg %p109
        $region46: #{tpu_custom_call.1} parent=35 // pred_check_branch
          %289 = sbr.rel (%p287) target = $region48
        $region47: #{tpu_custom_call.1} parent=35 // pred_region
          %291 = dma.done %s283, 96
        $region48: #{tpu_custom_call.1} parent=35 // pred_fallthru
          _
        %s292 = sand.u32 %s25, 1
        %s293 = scalar_lea.sflag [#allocation8], %s292
        %s294 = sand.u32 %s124, 1
        %s295 = smul.addr %s294, 6
        %s296 = scalar_lea.vmem [#allocation9], %s295
        // Predicated region
        $region49: #{tpu_custom_call.1} parent=35 // pred_check
          %p297 = pneg %p137
        $region50: #{tpu_custom_call.1} parent=35 // pred_check_branch
          %299 = sbr.rel (%p297) target = $region52
        $region51: #{tpu_custom_call.1} parent=35 // pred_region
          %301 = dma.done %s293, 96
        $region52: #{tpu_custom_call.1} parent=35 // pred_fallthru
          _
        %302 = sfence
        %p303 = pneg %p53
        %p304 = pneg %p50
        %s305 = sand.u32 %s68, 1
        %s306 = scalar_lea.sflag [#allocation3], %s305
        %s307 = sand.u32 %s68, 1
        %s308 = smul.addr %s307, 2
        %s309 = scalar_lea.vmem [#allocation6], %s308
        %p310 = pneg %p81
        %p311 = pneg %p78
        %s312 = sand.u32 %s25, 1
        %s313 = scalar_lea.sflag [#allocation8], %s312
        %s314 = sand.u32 %s96, 1
        %s315 = smul.addr %s314, 6
        %s316 = scalar_lea.vmem [#allocation7], %s315
        %p317 = pneg %p109
        %p318 = pneg %p106
        %s319 = sand.u32 %s25, 1
        %s320 = scalar_lea.sflag [#allocation8], %s319
        %s321 = sand.u32 %s124, 1
        %s322 = smul.addr %s321, 6
        %s323 = scalar_lea.vmem [#allocation9], %s322
        %p324 = pneg %p137
        %p325 = pneg %p134
        %p326 = pneg %p165
        %p327 = pneg %p162
        %s328 = sand.u32 %s152, 1
        %s329 = scalar_lea.sflag [#allocation4], %s328
        %s330 = sand.u32 %s152, 1
        %s331 = smul.addr %s330, 2
        %s332 = scalar_lea.vmem [#allocation10], %s331
        %s333 = sld [smem:[#allocation2 + %s29]]
        %v334 = vld [vmem:[%s276] sm:$0x3]
        %v335 = vld [vmem:[%s286] sm:$0x3]
        %v336 = vld [vmem:[%s286 + $0x2] sm:$0x3]
        %v337 = vld [vmem:[%s286 + $0x4] sm:$0x3]
        %v338 = vld [vmem:[%s296] sm:$0x3]
        %v339 = vld [vmem:[%s296 + $0x2] sm:$0x3]
        %v340 = vld [vmem:[%s296 + $0x4] sm:$0x3]
        %v341 = vrcp.pop %v334
        %v342 = vmul.f32 %v334, %v341
        %v343 = vsub.f32 1.0, %v342
        %v344 = vmul.f32 %v341, %v343
        %v345 = vadd.f32 %v341, %v344
        %vm346 = vweird.f32 %v334
        %vm347 = vweird.f32 %v341
        %vm348 = vmor %vm346, %vm347
        %v349 = vsel %vm348, %v341, %v345
        %v350 = vand.u32 2147483647, %v334
        %vm351 = vcmp.eq.f32.partialorder %v350, 8.507059e+37
        %v352 = vand.u32 %v334, 2147483648
        %v353 = vor.u32 1.1754944e-38, %v352
        %v354 = vsel %vm351, %v353, %v349
        %v355 = vsub.f32 1.0, %v334
        %v356 = vstv %s333
        %v357 = vmul.f32 %v356, %v355
        %v358 = vsub.f32 %v335, %v357
        %v359 = vsub.f32 %v336, %v357
        %v360 = vsub.f32 %v337, %v357
        %v361 = vmul.f32 %v358, %v354
        %v362 = vmul.f32 %v359, %v354
        %v363 = vmul.f32 %v360, %v354
        %v364 = vmax.f32 %v361, 0.0
        %v365 = vmax.f32 %v362, 0.0
        %v366 = vmax.f32 %v363, 0.0
        %v367 = vmin.f32 %v364, 1.0
        %v368 = vmin.f32 %v365, 1.0
        %v369 = vmin.f32 %v366, 1.0
        %v370 = vsub.f32 %v367, %v338
        %v371 = vsub.f32 %v368, %v339
        %v372 = vsub.f32 %v369, %v340
        %v373 = vand.u32 2147483647, %v370
        %v374 = vand.u32 2147483647, %v371
        %v375 = vand.u32 2147483647, %v372
        %vm376 = vcmask 1041408
        %v377 = vsel %vm376, %v373, 0.0
        %v378 = vsel %vm376, %v374, 0.0
        %v379 = vadd.f32 %v377, %v378
        %v380 = vsel %vm376, %v375, 0.0
        %v381 = vadd.f32 %v379, %v380
        %382 = vst [vmem:[%s332] sm:$0x3] %v381
        %s383 = sand.u32 %s152, 1
        %s384 = scalar_lea.sflag [#allocation4], %s383
        %s385 = sand.u32 %s152, 1
        %s386 = smul.addr %s385, 2
        %s387 = scalar_lea.vmem [#allocation10], %s386
        // Predicated region
        $region53: #{tpu_custom_call.1} parent=35 // pred_check
          %p388 = pneg %p162
        $region54: #{tpu_custom_call.1} parent=35 // pred_check_branch
          %390 = sbr.rel (%p388) target = $region56
        $region55: #{tpu_custom_call.1} parent=35 // pred_region
          %392 = vsyncadd %s384, 0
          %s393 = sadd.s32 %s30, %s29
          %s394 = smul.addr %s393, 2
          %s395 = scalar_lea.hbm %s4, %s394
          %s397 = sshll.u32 %s387, 4
          %s398 = int_to_ptr.vmem [resolvable:$true] %s397
          %s399 = sshll.u32 %s395, 4
          %s400 = int_to_ptr.hbm [resolvable:$true] %s399
          %402 = dma.vmem_to_hbm [thread:$0]  %s398, 32, %s400, %s384
        $region56: #{tpu_custom_call.1} parent=35 // pred_fallthru
          _
      $region36: #{tpu_custom_call.1} parent=5 // pred_fallthru
        _
      %p403 = scmp.le.s32.totalorder 2, %s20
      // Predicated region
      $region57: #{tpu_custom_call.1} parent=5 // pred_check
        %p404 = pneg %p403
      $region58: #{tpu_custom_call.1} parent=5 // pred_check_branch
        %406 = sbr.rel (%p404) target = $region60
      $region59: #{tpu_custom_call.1} parent=5 // pred_region
        %s407 = ssub.s32 %s20, 2
        // Predicated region
        $region61: #{tpu_custom_call.1} parent=59 // pred_check
          %p408 = pneg %p168
        $region62: #{tpu_custom_call.1} parent=59 // pred_check_branch
          %410 = sbr.rel (%p408) target = $region64
        $region63: #{tpu_custom_call.1} parent=59 // pred_region
          %s411 = sand.u32 %s153, 1
          %s412 = scalar_lea.sflag [#allocation4], %s411
          %s413 = sand.u32 %s153, 1
          %s414 = smul.addr %s413, 2
          %s415 = scalar_lea.vmem [#allocation10], %s414
          %417 = dma.done %s412, 32
        $region64: #{tpu_custom_call.1} parent=59 // pred_fallthru
          _
      $region60: #{tpu_custom_call.1} parent=5 // pred_fallthru
        _
    $region6: #{tpu_custom_call.1} parent=1 // loop_footer
      %s24 = sadd.s32 1, %s20
    $region7: #{tpu_custom_call.1} parent=1 // loop_footer_branch
      %19 = sbr.rel target = $region3
    $region8: #{tpu_custom_call.1} parent=1 // loop_exit
      _
    %418 = vsyncpa [#allocation3], 1
    %s419 = scalar_lea.sflag [#allocation3], 1
    %420 = vsyncpa %s419, 1
    %421 = vsyncpa [#allocation8], 1
    %s422 = scalar_lea.sflag [#allocation8], 1
    %423 = vsyncpa %s422, 1
    %424 = vsyncpa [#allocation4], 1
    %s425 = scalar_lea.sflag [#allocation4], 1
    %426 = vsyncpa %s425, 1
    %427 = vsyncpa [#allocation5], 1
    %s428 = scalar_lea.sflag [#allocation5], 1
    %429 = vsyncpa %s428, 1

</llo_original>
